<compile_context>
chip_gen: v6e
topology: v6e:2x2x1
jax: 0.10.0
libtpu: 0.0.40
codegen_flags: <defaults>
</compile_context>

<pallas_src>
import functools

import jax
import jax.numpy as jnp
from jax.experimental import pallas as pl
from jax.experimental.pallas import tpu as pltpu

# ---------------- Small synthetic config ----------------
B, S, HID = 2, 8, 32                  # batch, seq, hidden_size
N_HEADS, N_KV_HEADS, HEAD_DIM = 4, 2, 16
N_REP = N_HEADS // N_KV_HEADS
MOE_INTER = 64                        # moe_intermediate_size
N_EXPERTS = 4
TOP_K = 2                             # num_experts_per_tok
NORM_TOPK = True
RMS_EPS = 1e-6
ROPE_THETA = 10000.0
SCALING = HEAD_DIM ** -0.5
NEG_INF = -1e30
VMEM_LIMIT = 32 * 1024 * 1024         # explicit scoped-VMEM budget (safe on v5e/v6e/v7x)


# ---------------- tiling helpers (no silent full-dim fallback) ----------------
def _tile(dim, pref):
    """Return (tile, padded_dim). Full-dim tile if dim <= pref, else pref tile
    with the dim zero-padded up to a tile multiple by the wrapper."""
    if dim <= pref:
        return dim, dim
    pad = (-dim) % pref
    return pref, dim + pad


def _pad_rows(x, rows):
    if x.shape[0] == rows:
        return x
    return jnp.pad(x, ((0, rows - x.shape[0]),) + ((0, 0),) * (x.ndim - 1))


# =====================================================================
# Fused input-RMSNorm + Q/K/V projections (bf16 MXU inputs, f32 accum)
# =====================================================================
def _ln_qkv_kernel(x_ref, lw_ref, qw_ref, kw_ref, vw_ref,
                   q_ref, k_ref, v_ref, *, eps):
    x = x_ref[...].astype(jnp.float32)
    var = jnp.mean(x * x, axis=-1, keepdims=True)
    h = ((x * jax.lax.rsqrt(var + eps)) * lw_ref[...]).astype(jnp.bfloat16)
    q_ref[...] = jnp.dot(h, qw_ref[...],
                         preferred_element_type=jnp.float32).astype(q_ref.dtype)
    k_ref[...] = jnp.dot(h, kw_ref[...],
                         preferred_element_type=jnp.float32).astype(k_ref.dtype)
    v_ref[...] = jnp.dot(h, vw_ref[...],
                         preferred_element_type=jnp.float32).astype(v_ref.dtype)


def rmsnorm_qkv(x, ln_w, q_w, k_w, v_w, eps=RMS_EPS, row_tile=256):
    t, hid = x.shape
    qd, kd, vd = q_w.shape[1], k_w.shape[1], v_w.shape[1]
    tt, tp = _tile(t, row_tile)
    xp = _pad_rows(x, tp)
    q, k, v = pl.pallas_call(
        functools.partial(_ln_qkv_kernel, eps=eps),
        out_shape=(jax.ShapeDtypeStruct((tp, qd), jnp.bfloat16),
                   jax.ShapeDtypeStruct((tp, kd), jnp.bfloat16),
                   jax.ShapeDtypeStruct((tp, vd), jnp.bfloat16)),
        grid=(tp // tt,),
        in_specs=[pl.BlockSpec((tt, hid), lambda i: (i, 0)),
                  pl.BlockSpec((1, hid), lambda i: (0, 0)),
                  pl.BlockSpec((hid, qd), lambda i: (0, 0)),
                  pl.BlockSpec((hid, kd), lambda i: (0, 0)),
                  pl.BlockSpec((hid, vd), lambda i: (0, 0))],
        out_specs=(pl.BlockSpec((tt, qd), lambda i: (i, 0)),
                   pl.BlockSpec((tt, kd), lambda i: (i, 0)),
                   pl.BlockSpec((tt, vd), lambda i: (i, 0))),
        compiler_params=pltpu.CompilerParams(
            dimension_semantics=("parallel",), vmem_limit_bytes=VMEM_LIMIT),
    )(xp, ln_w.reshape(1, -1), q_w, k_w, v_w)
    if tp != t:
        q, k, v = q[:t], k[:t], v[:t]
    return q, k, v


# =====================================================================
# Fused post-attention RMSNorm + router projection
# =====================================================================
def _ln_router_kernel(x_ref, lw_ref, gw_ref, h_ref, lg_ref, *, eps):
    x = x_ref[...].astype(jnp.float32)
    var = jnp.mean(x * x, axis=-1, keepdims=True)
    h = (x * jax.lax.rsqrt(var + eps)) * lw_ref[...]
    hb = h.astype(jnp.bfloat16)
    h_ref[...] = hb
    lg_ref[...] = jnp.dot(hb, gw_ref[...],
                          preferred_element_type=jnp.float32).astype(lg_ref.dtype)


def rmsnorm_router(x, ln_w, gate_w, eps=RMS_EPS, row_tile=256):
    t, hid = x.shape
    e = gate_w.shape[1]
    tt, tp = _tile(t, row_tile)
    xp = _pad_rows(x, tp)
    h, lg = pl.pallas_call(
        functools.partial(_ln_router_kernel, eps=eps),
        out_shape=(jax.ShapeDtypeStruct((tp, hid), jnp.bfloat16),
                   jax.ShapeDtypeStruct((tp, e), jnp.float32)),
        grid=(tp // tt,),
        in_specs=[pl.BlockSpec((tt, hid), lambda i: (i, 0)),
                  pl.BlockSpec((1, hid), lambda i: (0, 0)),
                  pl.BlockSpec((hid, e), lambda i: (0, 0))],
        out_specs=(pl.BlockSpec((tt, hid), lambda i: (i, 0)),
                   pl.BlockSpec((tt, e), lambda i: (i, 0))),
        compiler_params=pltpu.CompilerParams(
            dimension_semantics=("parallel",), vmem_limit_bytes=VMEM_LIMIT),
    )(xp, ln_w.reshape(1, -1), gate_w)
    if tp != t:
        h, lg = h[:t], lg[:t]
    return h, lg


# =====================================================================
# Tiled matmul (M, N, K grid + f32 VMEM accumulator); 256-wide default
# tiles (v6e/v7x MXU), pad-in-wrapper instead of full-dim fallback.
# =====================================================================
def _matmul_kernel(x_ref, w_ref, o_ref, acc_ref):
    @pl.when(pl.program_id(2) == 0)
    def _():
        acc_ref[...] = jnp.zeros_like(acc_ref)

    acc_ref[...] += jnp.dot(x_ref[...], w_ref[...],
                            preferred_element_type=jnp.float32)

    @pl.when(pl.program_id(2) == pl.num_programs(2) - 1)
    def _():
        o_ref[...] = acc_ref[...].astype(o_ref.dtype)


def matmul(x, w, out_dtype=None, tm=256, tn=256, tk=256):
    m, k = x.shape
    _, n = w.shape
    out_dtype = out_dtype or x.dtype
    tm, mp = _tile(m, tm)
    tn, np_ = _tile(n, tn)
    tk, kp = _tile(k, tk)
    if mp != m or kp != k:
        x = jnp.pad(x, ((0, mp - m), (0, kp - k)))
    if kp != k or np_ != n:
        w = jnp.pad(w, ((0, kp - k), (0, np_ - n)))
    out = pl.pallas_call(
        _matmul_kernel,
        out_shape=jax.ShapeDtypeStruct((mp, np_), out_dtype),
        grid=(mp // tm, np_ // tn, kp // tk),
        in_specs=[pl.BlockSpec((tm, tk), lambda i, j, kk: (i, kk)),
                  pl.BlockSpec((tk, tn), lambda i, j, kk: (kk, j))],
        out_specs=pl.BlockSpec((tm, tn), lambda i, j, kk: (i, j)),
        scratch_shapes=[pltpu.VMEM((tm, tn), jnp.float32)],
        compiler_params=pltpu.CompilerParams(
            dimension_semantics=("parallel", "parallel", "arbitrary"),
            vmem_limit_bytes=VMEM_LIMIT),
    )(x, w)
    if mp != m or np_ != n:
        out = out[:m, :n]
    return out


# =====================================================================
# Attention: per-head q/k RMSNorm + RoPE + causal SDPA, fused.
#   * operates directly on (T, H*D)/(T, KV*D) activations -> no XLA transposes
#   * one grid step per batch processes all heads: K/V of each group DMA'd once
#     and reused by all n_rep query heads; output written as one lane-dense
#     (S, H*D) block.
# =====================================================================
def _attn_kernel(q_ref, k_ref, v_ref, cos_ref, sin_ref, qw_ref, kw_ref,
                 o_ref, *, scaling, eps, n_heads, n_kv, head_dim):
    n_rep = n_heads // n_kv
    cos = cos_ref[...]                               # (S, D) f32
    sin = sin_ref[...]
    qw = qw_ref[...]                                 # (1, D) f32
    kw = kw_ref[...]

    q_all = q_ref[...].astype(jnp.float32)           # (S, H*D)
    k_all = k_ref[...].astype(jnp.float32)           # (S, KV*D)
    v_all = v_ref[...]                               # (S, KV*D) bf16

    def _rms(x, w):                                  # per-head RMSNorm over head_dim
        var = jnp.mean(x * x, axis=-1, keepdims=True)
        return (x * jax.lax.rsqrt(var + eps)) * w

    def _rope(x):                                    # rotate_half RoPE
        half = head_dim // 2
        rot = jnp.concatenate([-x[:, half:], x[:, :half]], axis=-1)
        return x * cos + rot * sin

    outs = []
    for g in range(n_kv):
        k = _rope(_rms(k_all[:, g * head_dim:(g + 1) * head_dim], kw)).astype(jnp.bfloat16)
        v = v_all[:, g * head_dim:(g + 1) * head_dim]
        for r in range(n_rep):
            h = g * n_rep + r
            q = _rope(_rms(q_all[:, h * head_dim:(h + 1) * head_dim], qw)).astype(jnp.bfloat16)
            s = jax.lax.dot_general(
                q, k, dimension_numbers=(((1,), (1,)), ((), ())),
                preferred_element_type=jnp.float32) * scaling          # (S, S)
            rows = jax.lax.broadcasted_iota(jnp.int32, s.shape, 0)
            cols = jax.lax.broadcasted_iota(jnp.int32, s.shape, 1)
            s = jnp.where(cols <= rows, s, NEG_INF)                    # in-kernel causal mask
            s = s - jnp.max(s, axis=-1, keepdims=True)
            p = jnp.exp(s)
            p = p / jnp.sum(p, axis=-1, keepdims=True)                 # exact for validation
            outs.append(jnp.dot(p.astype(v.dtype), v,
                                preferred_element_type=jnp.float32))
    # single lane-dense (S, H*D) store
    o_ref[...] = jnp.concatenate(outs, axis=-1).astype(o_ref.dtype)


def attention(q2d, k2d, v2d, cos, sin, q_norm_w, k_norm_w, *, batch,
              n_heads, n_kv, head_dim, scaling=SCALING):
    t, qd = q2d.shape
    kvd = k2d.shape[1]
    s = t // batch
    return pl.pallas_call(
        functools.partial(_attn_kernel, scaling=scaling, eps=RMS_EPS,
                          n_heads=n_heads, n_kv=n_kv, head_dim=head_dim),
        out_shape=jax.ShapeDtypeStruct((t, qd), q2d.dtype),
        grid=(batch,),
        in_specs=[
            pl.BlockSpec((s, qd), lambda b: (b, 0)),
            pl.BlockSpec((s, kvd), lambda b: (b, 0)),
            pl.BlockSpec((s, kvd), lambda b: (b, 0)),
            pl.BlockSpec((s, head_dim), lambda b: (0, 0)),
            pl.BlockSpec((s, head_dim), lambda b: (0, 0)),
            pl.BlockSpec((1, head_dim), lambda b: (0, 0)),
            pl.BlockSpec((1, head_dim), lambda b: (0, 0)),
        ],
        out_specs=pl.BlockSpec((s, qd), lambda b: (b, 0)),
        compiler_params=pltpu.CompilerParams(
            dimension_semantics=("parallel",), vmem_limit_bytes=VMEM_LIMIT),
    )(q2d, k2d, v2d, cos, sin, q_norm_w.reshape(1, -1), k_norm_w.reshape(1, -1))


# =====================================================================
# MoE experts: grid (token_tiles["parallel"], experts["arbitrary"]).
#   * f32 VMEM output accumulator, written once at the last expert
#   * per-expert token counts scalar-prefetched -> empty experts skip compute
#   * fetch_idx scalar-prefetched -> weight index_map maps empty experts to the
#     previously fetched expert block so Pallas dedups the weight DMA
#   * route_w passed once as (T, E); expert column selected in-kernel.
# =====================================================================
def _moe_kernel(cnt_ref, fidx_ref, x_ref, gw_ref, uw_ref, dw_ref, rw_ref,
                o_ref, acc_ref):
    e = pl.program_id(1)

    @pl.when(e == 0)
    def _():
        acc_ref[...] = jnp.zeros_like(acc_ref)

    @pl.when(cnt_ref[e] > 0)                         # skip experts w/o routed tokens
    def _():
        x = x_ref[...]                                               # (tt, HID) bf16
        g = jnp.dot(x, gw_ref[0], preferred_element_type=jnp.float32)
        u = jnp.dot(x, uw_ref[0], preferred_element_type=jnp.float32)
        sig = 1.0 / (1.0 + jnp.exp(-g))                              # exact sigmoid
        h = (g * sig) * u                                            # SiLU(gate) * up
        d = jnp.dot(h.astype(x.dtype), dw_ref[0],
                    preferred_element_type=jnp.float32)              # (tt, HID)
        rw = rw_ref[...]                                             # (tt, E) f32
        col = jax.lax.broadcasted_iota(jnp.int32, rw.shape, 1) == e
        w_e = jnp.sum(jnp.where(col, rw, 0.0), axis=-1, keepdims=True)
        acc_ref[...] += d * w_e

    @pl.when(e == pl.num_programs(1) - 1)
    def _():
        o_ref[...] = acc_ref[...].astype(o_ref.dtype)


def moe_experts(x, gate_w, up_w, down_w, route_w, expert_counts, fetch_idx,
                row_tile=256):
    # x: (T, HID) bf16; gate/up: (E, HID, I) bf16; down: (E, I, HID) bf16
    # route_w: (T, E) f32; expert_counts / fetch_idx: (E,) int32 (scalar prefetch)
    t, hid = x.shape
    e, _, inter = gate_w.shape
    tt, tp = _tile(t, row_tile)
    xp = _pad_rows(x, tp)
    rwp = _pad_rows(route_w, tp)
    out = pl.pallas_call(
        _moe_kernel,
        out_shape=jax.ShapeDtypeStruct((tp, hid), jnp.float32),
        grid_spec=pltpu.PrefetchScalarGridSpec(
            num_scalar_prefetch=2,
            grid=(tp // tt, e),
            in_specs=[
                pl.BlockSpec((tt, hid), lambda ti, ei, cnt, fidx: (ti, 0)),
                # inactive experts map to the previously fetched block -> DMA deduped
                pl.BlockSpec((1, hid, inter), lambda ti, ei, cnt, fidx: (fidx[ei], 0, 0)),
                pl.BlockSpec((1, hid, inter), lambda ti, ei, cnt, fidx: (fidx[ei], 0, 0)),
                pl.BlockSpec((1, inter, hid), lambda ti, ei, cnt, fidx: (fidx[ei], 0, 0)),
                pl.BlockSpec((tt, e), lambda ti, ei, cnt, fidx: (ti, 0)),
            ],
            out_specs=pl.BlockSpec((tt, hid), lambda ti, ei, cnt, fidx: (ti, 0)),
            scratch_shapes=[pltpu.VMEM((tt, hid), jnp.float32)]),
        compiler_params=pltpu.CompilerParams(
            dimension_semantics=("parallel", "arbitrary"),
            vmem_limit_bytes=VMEM_LIMIT),
    )(expert_counts, fetch_idx, xp, gate_w, up_w, down_w, rwp)
    if tp != t:
        out = out[:t]
    return out


# ---------------- Glue (plain JAX) ----------------
def rotary_cos_sin(seq_len, dim, theta):
    inv_freq = 1.0 / (theta ** (jnp.arange(0, dim, 2, dtype=jnp.float32) / dim))
    pos = jnp.arange(seq_len, dtype=jnp.float32)
    freqs = jnp.outer(pos, inv_freq)                      # (S, D/2)
    emb = jnp.concatenate([freqs, freqs], axis=-1)        # (S, D)
    return jnp.cos(emb), jnp.sin(emb)


def init_params(key):
    ks = jax.random.split(key, 8)
    sc = 0.02
    bf = jnp.bfloat16
    return {
        "input_ln_w": jnp.ones((HID,), jnp.float32),
        "post_ln_w": jnp.ones((HID,), jnp.float32),
        "q_norm_w": jnp.ones((HEAD_DIM,), jnp.float32),
        "k_norm_w": jnp.ones((HEAD_DIM,), jnp.float32),
        # bf16 MXU-side weights, f32 accumulation in-kernel
        "q_w": (sc * jax.random.normal(ks[0], (HID, N_HEADS * HEAD_DIM), jnp.float32)).astype(bf),
        "k_w": (sc * jax.random.normal(ks[1], (HID, N_KV_HEADS * HEAD_DIM), jnp.float32)).astype(bf),
        "v_w": (sc * jax.random.normal(ks[2], (HID, N_KV_HEADS * HEAD_DIM), jnp.float32)).astype(bf),
        "o_w": (sc * jax.random.normal(ks[3], (N_HEADS * HEAD_DIM, HID), jnp.float32)).astype(bf),
        "gate_w": (sc * jax.random.normal(ks[4], (HID, N_EXPERTS), jnp.float32)).astype(bf),
        "expert_gate_w": (sc * jax.random.normal(ks[5], (N_EXPERTS, HID, MOE_INTER), jnp.float32)).astype(bf),
        "expert_up_w": (sc * jax.random.normal(ks[6], (N_EXPERTS, HID, MOE_INTER), jnp.float32)).astype(bf),
        "expert_down_w": (sc * jax.random.normal(ks[7], (N_EXPERTS, MOE_INTER, HID), jnp.float32)).astype(bf),
    }


def qwen3_moe_decoder_layer(params, hidden_states, cos, sin):
    b, s, hid = hidden_states.shape
    t = b * s

    # ---------------- self attention ----------------
    residual = hidden_states
    x2d = hidden_states.reshape(t, hid)

    # fused input-RMSNorm + q/k/v projections (single kernel, bf16 outputs)
    q2d, k2d, v2d = rmsnorm_qkv(x2d, params["input_ln_w"],
                                params["q_w"], params["k_w"], params["v_w"])

    # fused q/k RMSNorm + RoPE + causal SDPA; operates directly on the
    # (T, H*D)/(T, KV*D) layout -> no XLA transposes, GQA reuse by construction
    attn2d = attention(q2d, k2d, v2d, cos, sin,
                       params["q_norm_w"], params["k_norm_w"],
                       batch=b, n_heads=N_HEADS, n_kv=N_KV_HEADS,
                       head_dim=HEAD_DIM, scaling=SCALING)

    attn_out = matmul(attn2d, params["o_w"], out_dtype=jnp.float32)   # (T, HID)
    hidden_states = residual + attn_out.reshape(b, s, hid)

    # ---------------- sparse MoE block ----------------
    residual = hidden_states
    x2d = hidden_states.reshape(t, hid)

    # fused post-LN + router projection (h in bf16, logits in f32)
    h, router_logits = rmsnorm_router(x2d, params["post_ln_w"], params["gate_w"])

    routing = jax.nn.softmax(router_logits, axis=-1)                   # f32
    top_vals, top_idx = jax.lax.top_k(routing, TOP_K)
    if NORM_TOPK:
        top_vals = top_vals / jnp.sum(top_vals, axis=-1, keepdims=True)

    one_hot = jax.nn.one_hot(top_idx, N_EXPERTS, dtype=jnp.float32)    # (T, K, E)
    route_w = jnp.sum(one_hot * top_vals[..., None], axis=1)           # (T, E) f32
    expert_counts = jnp.sum(one_hot, axis=(0, 1)).astype(jnp.int32)    # (E,)
    # fetch_idx[e]: last active expert index <= e (inactive experts re-use the
    # previous fetch so the weight DMA is deduped; compute is skipped anyway)
    idx = jnp.arange(N_EXPERTS, dtype=jnp.int32)
    fetch_idx = jnp.maximum(
        jax.lax.cummax(jnp.where(expert_counts > 0, idx, -1)), 0).astype(jnp.int32)

    moe_out = moe_experts(h, params["expert_gate_w"], params["expert_up_w"],
                          params["expert_down_w"], route_w, expert_counts,
                          fetch_idx, row_tile=8)                       # 2 parallel token tiles

    hidden_states = residual + moe_out.reshape(b, s, hid)
    return hidden_states, router_logits


if __name__ == "__main__":
    key = jax.random.PRNGKey(0)
    k_params, k_input = jax.random.split(key)
    params = init_params(k_params)
    hidden_states = jax.random.normal(k_input, (B, S, HID), jnp.float32)

    # rotary tables hoisted out of the layer (computed once per model)
    cos, sin = rotary_cos_sin(S, HEAD_DIM, ROPE_THETA)

    out, router_logits = qwen3_moe_decoder_layer(params, hidden_states, cos, sin)
    jax.block_until_ready(out)
    jax.block_until_ready(router_logits)

    assert out.shape == (B, S, HID)
    assert router_logits.shape == (B * S, N_EXPERTS)
    assert bool(jnp.all(jnp.isfinite(out)))
    assert bool(jnp.all(jnp.isfinite(router_logits)))
    print("KERNEL_OK")
</pallas_src>

<mosaic_0001>
module attributes {stable_mosaic.version = 11 : i64} {
  func.func @_ln_qkv_kernel(%arg0: i32, %arg1: memref<16x32xf32, #tpu.memory_space<vmem>>, %arg2: memref<1x32xf32, #tpu.memory_space<vmem>>, %arg3: memref<32x64xbf16, #tpu.memory_space<vmem>>, %arg4: memref<32x32xbf16, #tpu.memory_space<vmem>>, %arg5: memref<32x32xbf16, #tpu.memory_space<vmem>>, %arg6: memref<16x64xbf16, #tpu.memory_space<vmem>>, %arg7: memref<16x32xbf16, #tpu.memory_space<vmem>>, %arg8: memref<16x32xbf16, #tpu.memory_space<vmem>>) attributes {dimension_semantics = [#tpu.dimension_semantics<parallel>], iteration_bounds = array<i64: 1>, scalar_prefetch = 0 : i64, scratch_operands = 0 : i64, tpu.core_type = #tpu.core_type<tc>, window_params = [{transform_indices = @transform_0, window_bounds = array<i64: 16, 32>}, {pipeline_mode = #tpu.pipeline_mode<synchronous>, transform_indices = @transform_1, window_bounds = array<i64: 1, 32>}, {pipeline_mode = #tpu.pipeline_mode<synchronous>, transform_indices = @transform_2, window_bounds = array<i64: 32, 64>}, {pipeline_mode = #tpu.pipeline_mode<synchronous>, transform_indices = @transform_3, window_bounds = array<i64: 32, 32>}, {pipeline_mode = #tpu.pipeline_mode<synchronous>, transform_indices = @transform_4, window_bounds = array<i64: 32, 32>}, {transform_indices = @transform_5, window_bounds = array<i64: 16, 64>}, {transform_indices = @transform_6, window_bounds = array<i64: 16, 32>}, {transform_indices = @transform_7, window_bounds = array<i64: 16, 32>}]} {
    %c0 = arith.constant 0 : index
    %c0_0 = arith.constant 0 : index
    %0 = vector.load %arg1[%c0, %c0_0] : memref<16x32xf32, #tpu.memory_space<vmem>>, vector<16x32xf32>
    %1 = arith.mulf %0, %0 : vector<16x32xf32>
    %cst = arith.constant dense<0.000000e+00> : vector<16xf32>
    %2 = vector.multi_reduction <add>, %1, %cst [1] : vector<16x32xf32> to vector<16xf32>
    %3 = vector.shape_cast %2 : vector<16xf32> to vector<16x1xf32>
    %cst_1 = arith.constant 3.200000e+01 : f32
    %4 = vector.broadcast %cst_1 : f32 to vector<16x1xf32>
    %5 = arith.divf %3, %4 : vector<16x1xf32>
    %cst_2 = arith.constant 9.99999997E-7 : f32
    %6 = vector.broadcast %cst_2 : f32 to vector<16x1xf32>
    %7 = arith.addf %5, %6 : vector<16x1xf32>
    %8 = math.rsqrt %7 : vector<16x1xf32>
    %9 = vector.broadcast %8 : vector<16x1xf32> to vector<16x32xf32>
    %10 = arith.mulf %0, %9 : vector<16x32xf32>
    %c0_3 = arith.constant 0 : index
    %c0_4 = arith.constant 0 : index
    %11 = vector.load %arg2[%c0_3, %c0_4] : memref<1x32xf32, #tpu.memory_space<vmem>>, vector<1x32xf32>
    %12 = vector.broadcast %11 : vector<1x32xf32> to vector<16x32xf32>
    %13 = arith.mulf %10, %12 : vector<16x32xf32>
    %14 = arith.truncf %13 : vector<16x32xf32> to vector<16x32xbf16>
    %c0_5 = arith.constant 0 : index
    %c0_6 = arith.constant 0 : index
    %15 = vector.load %arg3[%c0_5, %c0_6] : memref<32x64xbf16, #tpu.memory_space<vmem>>, vector<32x64xbf16>
    %cst_7 = arith.constant dense<0.000000e+00> : vector<16x64xf32>
    %16 = tpu.matmul %14, %15, %cst_7 {dimension_numbers = #tpu.dot_dimension_numbers<[1], [0], [0], [1], [0, 0, 1, 1], [], []>} : vector<16x32xbf16>, vector<32x64xbf16>, vector<16x64xf32> -> vector<16x64xf32>
    %17 = arith.truncf %16 : vector<16x64xf32> to vector<16x64xbf16>
    %c0_8 = arith.constant 0 : index
    %c0_9 = arith.constant 0 : index
    %18 = vector.load %arg6[%c0_8, %c0_9] : memref<16x64xbf16, #tpu.memory_space<vmem>>, vector<16x64xbf16>
    tpu.vector_store %arg6[%c0_8, %c0_9], %17 {strides = array<i32>} : memref<16x64xbf16, #tpu.memory_space<vmem>>, vector<16x64xbf16>,
    %c0_10 = arith.constant 0 : index
    %c0_11 = arith.constant 0 : index
    %19 = vector.load %arg4[%c0_10, %c0_11] : memref<32x32xbf16, #tpu.memory_space<vmem>>, vector<32x32xbf16>
    %cst_12 = arith.constant dense<0.000000e+00> : vector<16x32xf32>
    %20 = tpu.matmul %14, %19, %cst_12 {dimension_numbers = #tpu.dot_dimension_numbers<[1], [0], [0], [1], [0, 0, 1, 1], [], []>} : vector<16x32xbf16>, vector<32x32xbf16>, vector<16x32xf32> -> vector<16x32xf32>
    %21 = arith.truncf %20 : vector<16x32xf32> to vector<16x32xbf16>
    %c0_13 = arith.constant 0 : index
    %c0_14 = arith.constant 0 : index
    %22 = vector.load %arg7[%c0_13, %c0_14] : memref<16x32xbf16, #tpu.memory_space<vmem>>, vector<16x32xbf16>
    tpu.vector_store %arg7[%c0_13, %c0_14], %21 {strides = array<i32>} : memref<16x32xbf16, #tpu.memory_space<vmem>>, vector<16x32xbf16>,
    %c0_15 = arith.constant 0 : index
    %c0_16 = arith.constant 0 : index
    %23 = vector.load %arg5[%c0_15, %c0_16] : memref<32x32xbf16, #tpu.memory_space<vmem>>, vector<32x32xbf16>
    %cst_17 = arith.constant dense<0.000000e+00> : vector<16x32xf32>
    %24 = tpu.matmul %14, %23, %cst_17 {dimension_numbers = #tpu.dot_dimension_numbers<[1], [0], [0], [1], [0, 0, 1, 1], [], []>} : vector<16x32xbf16>, vector<32x32xbf16>, vector<16x32xf32> -> vector<16x32xf32>
    %25 = arith.truncf %24 : vector<16x32xf32> to vector<16x32xbf16>
    %c0_18 = arith.constant 0 : index
    %c0_19 = arith.constant 0 : index
    %26 = vector.load %arg8[%c0_18, %c0_19] : memref<16x32xbf16, #tpu.memory_space<vmem>>, vector<16x32xbf16>
    tpu.vector_store %arg8[%c0_18, %c0_19], %25 {strides = array<i32>} : memref<16x32xbf16, #tpu.memory_space<vmem>>, vector<16x32xbf16>,
    return
  }
  func.func @transform_0(%arg0: i32) -> (i32, i32) {
    %c0_i32 = arith.constant 0 : i32
    %c0_i32_0 = arith.constant 0 : i32
    return %arg0, %c0_i32 : i32, i32
  }
  func.func @transform_1(%arg0: i32) -> (i32, i32) {
    %c0_i32 = arith.constant 0 : i32
    %c0_i32_0 = arith.constant 0 : i32
    %c0_i32_1 = arith.constant 0 : i32
    return %c0_i32, %c0_i32_0 : i32, i32
  }
  func.func @transform_2(%arg0: i32) -> (i32, i32) {
    %c0_i32 = arith.constant 0 : i32
    %c0_i32_0 = arith.constant 0 : i32
    %c0_i32_1 = arith.constant 0 : i32
    return %c0_i32, %c0_i32_0 : i32, i32
  }
  func.func @transform_3(%arg0: i32) -> (i32, i32) {
    %c0_i32 = arith.constant 0 : i32
    %c0_i32_0 = arith.constant 0 : i32
    %c0_i32_1 = arith.constant 0 : i32
    return %c0_i32, %c0_i32_0 : i32, i32
  }
  func.func @transform_4(%arg0: i32) -> (i32, i32) {
    %c0_i32 = arith.constant 0 : i32
    %c0_i32_0 = arith.constant 0 : i32
    %c0_i32_1 = arith.constant 0 : i32
    return %c0_i32, %c0_i32_0 : i32, i32
  }
  func.func @transform_5(%arg0: i32) -> (i32, i32) {
    %c0_i32 = arith.constant 0 : i32
    %c0_i32_0 = arith.constant 0 : i32
    return %arg0, %c0_i32 : i32, i32
  }
  func.func @transform_6(%arg0: i32) -> (i32, i32) {
    %c0_i32 = arith.constant 0 : i32
    %c0_i32_0 = arith.constant 0 : i32
    return %arg0, %c0_i32 : i32, i32
  }
  func.func @transform_7(%arg0: i32) -> (i32, i32) {
    %c0_i32 = arith.constant 0 : i32
    %c0_i32_0 = arith.constant 0 : i32
    return %arg0, %c0_i32 : i32, i32
  }
}

</mosaic_0001>

<llo_original>
// kernel: tpu_custom_call.1
$region0: #{tpu_custom_call.1}
  #allocation0 [shape = 'u32[]', space=smem, size = 0x4, offset = 0x4, fixed_abs, tag = 'smem constant byte address 0x4 - core index']
  #allocation1 [shape = 'u32[144,128]{1,0:T(1,128)}', space=vmem, size = 0x12000, scoped, tag = 'internal scratch']
  %s0 = inlined_call_operand.hbm [shape: f32[16,32], index: 0, kind: input, shape index: {}]
  %s1 = inlined_call_operand.vmem [shape: f32[1,32], index: 1, kind: input, shape index: {}]
  %s2 = inlined_call_operand.hbm [shape: bf16[32,64], index: 2, kind: input, shape index: {}]
  %s3 = inlined_call_operand.hbm [shape: bf16[32,32], index: 3, kind: input, shape index: {}]
  %s4 = inlined_call_operand.hbm [shape: bf16[32,32], index: 4, kind: input, shape index: {}]
  %s5 = inlined_call_operand.hbm [shape: bf16[16,64], index: 5, kind: output, shape index: {0}]
  %s6 = inlined_call_operand.hbm [shape: bf16[16,32], index: 6, kind: output, shape index: {1}]
  %s7 = inlined_call_operand.hbm [shape: bf16[16,32], index: 7, kind: output, shape index: {2}]
  %8 = xla_tuple %s5, %s6, %s7
  %s9 = sld [smem:[#allocation0]]
  $region62: #{tpu_custom_call.1} parent=0
    _
  %s11 = ssub.s32 1, %s9
  %s12 = scalar_select 0, %s11, %s9
  $region1: #{tpu_custom_call.1} parent=0
    #allocation2 [shape = 'u8[8192]{0}', space=vmem, size = 0x2000, scoped, tag = 'input window, operand 0, single buffered']
    #allocation3 [shape = 's32[1]{0}', space=sflag, size = 0x4, scoped, tag = 'scoped memory for tpu_custom_call.1']
    #allocation4 [shape = 's32[1]{0}', space=sflag, size = 0x4, scoped, tag = 'scoped memory for tpu_custom_call.1']
    #allocation5 [shape = 'u8[8192]{0}', space=vmem, size = 0x2000, scoped, tag = 'input window, operand 2, single buffered']
    #allocation6 [shape = 's32[1]{0}', space=sflag, size = 0x4, scoped, tag = 'scoped memory for tpu_custom_call.1']
    #allocation7 [shape = 'u8[8192]{0}', space=vmem, size = 0x2000, scoped, tag = 'input window, operand 3, single buffered']
    #allocation8 [shape = 'u8[8192]{0}', space=vmem, size = 0x2000, scoped, tag = 'input window, operand 4, single buffered']
    #allocation9 [shape = 's32[1]{0}', space=sflag, size = 0x4, scoped, tag = 'scoped memory for tpu_custom_call.1']
    #allocation10 [shape = 'u8[4096]{0}', space=vmem, size = 0x1000, scoped, tag = 'output window, operand 0, single buffered']
    #allocation11 [shape = 'u8[4096]{0}', space=vmem, size = 0x1000, scoped, tag = 'output window, operand 1, single buffered']
    #allocation12 [shape = 's32[1]{0}', space=sflag, size = 0x4, scoped, tag = 'scoped memory for tpu_custom_call.1']
    #allocation13 [shape = 'u8[4096]{0}', space=vmem, size = 0x1000, scoped, tag = 'output window, operand 2, single buffered']
    %13 = vsyncpa [#allocation3], 0
    %14 = vsyncpa [#allocation6], 0
    %15 = vsyncpa [#allocation9], 0
    %16 = vsyncpa [#allocation4], 0
    %17 = vsyncpa [#allocation12], 0
    // Predicated region
    $region2: #{tpu_custom_call.1} parent=1 // pred_check
      _
    $region3: #{tpu_custom_call.1} parent=1 // pred_check_branch
      %19 = sbr.rel (0) target = $region5
    $region4: #{tpu_custom_call.1} parent=1 // pred_region
      %s21 = ssub.s32 256, 256
      %22 = vsyncadd [#allocation3], %s21
      %s23 = sshll.u32 [#allocation2], 4
      %s24 = int_to_ptr.vmem [resolvable:$true] %s23
      %29 = dma.hbm_to_vmem [thread:$0]  %s0, 256, %s24, [#allocation3], 128, 128, 8
    $region5: #{tpu_custom_call.1} parent=1 // pred_fallthru
      _
    // Predicated region
    $region6: #{tpu_custom_call.1} parent=1 // pred_check
      _
    $region7: #{tpu_custom_call.1} parent=1 // pred_check_branch
      %31 = sbr.rel (0) target = $region9
    $region8: #{tpu_custom_call.1} parent=1 // pred_region
      _
    $region9: #{tpu_custom_call.1} parent=1 // pred_fallthru
      _
    // Predicated region
    $region10: #{tpu_custom_call.1} parent=1 // pred_check
      _
    $region11: #{tpu_custom_call.1} parent=1 // pred_check_branch
      %33 = sbr.rel (0) target = $region13
    $region12: #{tpu_custom_call.1} parent=1 // pred_region
      %s35 = ssub.s32 256, 256
      %36 = vsyncadd [#allocation6], %s35
      %s37 = sshll.u32 [#allocation5], 4
      %s38 = int_to_ptr.vmem [resolvable:$true] %s37
      %43 = dma.hbm_to_vmem [thread:$0]  %s2, 256, %s38, [#allocation6], 64, 64, 4
    $region13: #{tpu_custom_call.1} parent=1 // pred_fallthru
      _
    // Predicated region
    $region14: #{tpu_custom_call.1} parent=1 // pred_check
      _
    $region15: #{tpu_custom_call.1} parent=1 // pred_check_branch
      %45 = sbr.rel (0) target = $region17
    $region16: #{tpu_custom_call.1} parent=1 // pred_region
      %s47 = ssub.s32 256, 256
      %48 = vsyncadd [#allocation6], %s47
      %s49 = sshll.u32 [#allocation7], 4
      %s50 = int_to_ptr.vmem [resolvable:$true] %s49
      %55 = dma.hbm_to_vmem [thread:$0]  %s3, 256, %s50, [#allocation6], 64, 64, 4
    $region17: #{tpu_custom_call.1} parent=1 // pred_fallthru
      _
    // Predicated region
    $region18: #{tpu_custom_call.1} parent=1 // pred_check
      _
    $region19: #{tpu_custom_call.1} parent=1 // pred_check_branch
      %57 = sbr.rel (0) target = $region21
    $region20: #{tpu_custom_call.1} parent=1 // pred_region
      %s59 = ssub.s32 256, 256
      %60 = vsyncadd [#allocation9], %s59
      %s61 = sshll.u32 [#allocation8], 4
      %s62 = int_to_ptr.vmem [resolvable:$true] %s61
      %67 = dma.hbm_to_vmem [thread:$0]  %s4, 256, %s62, [#allocation9], 64, 64, 4
    $region21: #{tpu_custom_call.1} parent=1 // pred_fallthru
      _
    // Predicated region
    $region22: #{tpu_custom_call.1} parent=1 // pred_check
      _
    $region23: #{tpu_custom_call.1} parent=1 // pred_check_branch
      %69 = sbr.rel (0) target = $region25
    $region24: #{tpu_custom_call.1} parent=1 // pred_region
      %70 = dma.done [#allocation3], 256
    $region25: #{tpu_custom_call.1} parent=1 // pred_fallthru
      _
    // Predicated region
    $region26: #{tpu_custom_call.1} parent=1 // pred_check
      _
    $region27: #{tpu_custom_call.1} parent=1 // pred_check_branch
      %72 = sbr.rel (0) target = $region29
    $region28: #{tpu_custom_call.1} parent=1 // pred_region
      %73 = dma.done [#allocation6], 256
    $region29: #{tpu_custom_call.1} parent=1 // pred_fallthru
      _
    // Predicated region
    $region30: #{tpu_custom_call.1} parent=1 // pred_check
      _
    $region31: #{tpu_custom_call.1} parent=1 // pred_check_branch
      %75 = sbr.rel (0) target = $region33
    $region32: #{tpu_custom_call.1} parent=1 // pred_region
      %76 = dma.done [#allocation6], 256
    $region33: #{tpu_custom_call.1} parent=1 // pred_fallthru
      _
    // Predicated region
    $region34: #{tpu_custom_call.1} parent=1 // pred_check
      _
    $region35: #{tpu_custom_call.1} parent=1 // pred_check_branch
      %78 = sbr.rel (0) target = $region37
    $region36: #{tpu_custom_call.1} parent=1 // pred_region
      %79 = dma.done [#allocation9], 256
    $region37: #{tpu_custom_call.1} parent=1 // pred_fallthru
      _
    %v81 = vld [vmem:[#allocation2] sm:$0xff]
    %v82 = vld [vmem:[#allocation2 + $0x8] sm:$0xff]
    %v83 = vmul.f32 %v81, %v81
    %v84 = vmul.f32 %v82, %v82
    %vm85 = vcmask 261120
    %v86 = vsel %vm85, %v83, 0.0
    %87 = vadd.xlane.f32.xlu0 %v86
    %v88 = vpop.xlane.xlu0 %87
    %v89 = vsel %vm85, %v84, 0.0
    %90 = vadd.xlane.f32.xlu0 %v89
    %v91 = vpop.xlane.xlu0 %90
    %v92 = vrcp.pop 32.0
    %v93 = vmul.f32 %v88, %v92
    %v94 = vmul.f32 %v91, %v92
    %v95 = vadd.f32 %v93, 1e-06
    %v96 = vadd.f32 %v94, 1e-06
    %v97 = vrsqrt.pop %v95
    %v98 = vrsqrt.pop %v96
    %v99 = vmul.f32 %v81, %v97
    %v100 = vmul.f32 %v82, %v98
    %v101 = vld [vmem:[%s1] sm:$0x1]
    %v103 = vlaneseq
    %v104 = vshrl.u32 %v103, 7
    %v105 = vsub.s32 0, %v104
    %v106 = vrot.slane %v101, %v105
    %v108 = vmul.f32 %v99, %v106
    %v109 = vmul.f32 %v100, %v106
    %v110 = vpack.c.bf16 %v109, %v108
    %v111 = vld [vmem:[#allocation5] sm:$0xf]
    %v112 = vld [vmem:[#allocation5 + $0x4] sm:$0xf]
    %v113 = vld [vmem:[#allocation5 + $0x8] sm:$0xf]
    %v114 = vld [vmem:[#allocation5 + $0xc] sm:$0xf]
    %v119 = vunpack.c.l.b16 %v111
    %v120 = vunpack.c.l.b16 %v112
    %v121 = vunpack.c.l.b16 %v113
    %v122 = vunpack.c.l.b16 %v114
    %v123 = vpack.c.b16 %v120, %v119
    %v124 = vpack.c.b16 %v122, %v121
    %v128 = vsel %vm85, %v110, 0
    %130 = vmatprep.subr.bf16.mxu0 0
    %131 = vmatpush1.bf16.msra.mxu0 0
    %132 = vmatprep.subr.bf16.mxu0 0
    %133 = vmatpush1.bf16.msra.mxu0 0
    %134 = vmatprep.subr.bf16.mxu0 0
    %135 = vmatpush1.bf16.msra.mxu0 0
    %136 = vmatprep.subr.bf16.mxu0 0
    %137 = vmatpush1.bf16.msra.mxu0 0
    %138 = vmatprep.subr.bf16.mxu0 0
    %139 = vmatpush1.bf16.msra.mxu0 0
    %140 = vmatprep.subr.bf16.mxu0 0
    %141 = vmatpush1.bf16.msra.mxu0 0
    %142 = vmatprep.subr.bf16.mxu0 0
    %143 = vmatpush1.bf16.msra.mxu0 %v124
    %144 = vmatprep.subr.bf16.mxu0 0
    %145 = vmatpush1.bf16.msra.mxu0 %v123
    %146 = vmatprep.subr.bf16.mxu0 0
    %147 = vmatpush2.bf16.msra.mxu0 0
    %148 = vmatprep.subr.bf16.mxu0 0
    %149 = vmatpush2.bf16.msra.mxu0 0
    %150 = vmatprep.subr.bf16.mxu0 0
    %151 = vmatpush2.bf16.msra.mxu0 0
    %152 = vmatprep.subr.bf16.mxu0 0
    %153 = vmatpush2.bf16.msra.mxu0 0
    %154 = vmatprep.subr.bf16.mxu0 0
    %155 = vmatpush2.bf16.msra.mxu0 0
    %156 = vmatprep.subr.bf16.mxu0 0
    %157 = vmatpush2.bf16.msra.mxu0 0
    %158 = vmatprep.subr.bf16.mxu0 0
    %159 = vmatpush2.bf16.msra.mxu0 0
    %160 = vmatprep.subr.bf16.mxu0 0
    %161 = vmatpush2.bf16.msra.mxu0 0
    %162 = vmatprep.mubr.bf16.mxu0 0
    %163 = vmatmul.mubr.bf16.gmra.mxu0 %v128
    %v164 = vpop.f32.mrf.mxu0
    %v165 = vadd.f32 0.0, %v164
    %v166 = vpop.f32.mrf.mxu0
    %v167 = vpop.f32.mrf.mxu0
    %v168 = vadd.f32 0.0, %v167
    %v169 = vpop.f32.mrf.mxu0
    %170 = vdwg.mxu0
    %v171 = vpack.c.bf16 %v168, %v165
    %v173 = vunpack.c.l.b16 %v171
    %v174 = vunpack.c.h.b16 %v171
    %v175 = vpack.c.b16 %v173, %v173
    %v176 = vpack.c.b16 %v174, %v174
    %vm179 = vcmask 519168
    %180 = vst.msk [vmem:[#allocation10] sm:$0xf] %vm179, %v175
    %181 = vst.msk [vmem:[#allocation10 + $0x4] sm:$0xf] %vm179, %v176
    %v182 = vld [vmem:[#allocation7] sm:$0xf]
    %v183 = vld [vmem:[#allocation7 + $0x4] sm:$0xf]
    %v184 = vld [vmem:[#allocation7 + $0x8] sm:$0xf]
    %v185 = vld [vmem:[#allocation7 + $0xc] sm:$0xf]
    %v190 = vunpack.c.l.b16 %v182
    %v191 = vunpack.c.l.b16 %v183
    %v192 = vunpack.c.l.b16 %v184
    %v193 = vunpack.c.l.b16 %v185
    %v194 = vpack.c.b16 %v191, %v190
    %v195 = vpack.c.b16 %v193, %v192
    %198 = vmatprep.subr.bf16.mxu0 0
    %199 = vmatpush1.bf16.msra.mxu0 0
    %200 = vmatprep.subr.bf16.mxu0 0
    %201 = vmatpush1.bf16.msra.mxu0 0
    %202 = vmatprep.subr.bf16.mxu0 0
    %203 = vmatpush1.bf16.msra.mxu0 0
    %204 = vmatprep.subr.bf16.mxu0 0
    %205 = vmatpush1.bf16.msra.mxu0 0
    %206 = vmatprep.subr.bf16.mxu0 0
    %207 = vmatpush1.bf16.msra.mxu0 0
    %208 = vmatprep.subr.bf16.mxu0 0
    %209 = vmatpush1.bf16.msra.mxu0 0
    %210 = vmatprep.subr.bf16.mxu0 0
    %211 = vmatpush1.bf16.msra.mxu0 %v195
    %212 = vmatprep.subr.bf16.mxu0 0
    %213 = vmatpush1.bf16.msra.mxu0 %v194
    %214 = vmatprep.subr.bf16.mxu0 0
    %215 = vmatpush2.bf16.msra.mxu0 0
    %216 = vmatprep.subr.bf16.mxu0 0
    %217 = vmatpush2.bf16.msra.mxu0 0
    %218 = vmatprep.subr.bf16.mxu0 0
    %219 = vmatpush2.bf16.msra.mxu0 0
    %220 = vmatprep.subr.bf16.mxu0 0
    %221 = vmatpush2.bf16.msra.mxu0 0
    %222 = vmatprep.subr.bf16.mxu0 0
    %223 = vmatpush2.bf16.msra.mxu0 0
    %224 = vmatprep.subr.bf16.mxu0 0
    %225 = vmatpush2.bf16.msra.mxu0 0
    %226 = vmatprep.subr.bf16.mxu0 0
    %227 = vmatpush2.bf16.msra.mxu0 0
    %228 = vmatprep.subr.bf16.mxu0 0
    %229 = vmatpush2.bf16.msra.mxu0 0
    %230 = vmatprep.mubr.bf16.mxu0 0
    %231 = vmatmul.mubr.bf16.gmra.mxu0 %v128
    %v232 = vpop.f32.mrf.mxu0
    %v233 = vadd.f32 0.0, %v232
    %v234 = vpop.f32.mrf.mxu0
    %v235 = vpop.f32.mrf.mxu0
    %v236 = vadd.f32 0.0, %v235
    %v237 = vpop.f32.mrf.mxu0
    %238 = vdwg.mxu0
    %v239 = vpack.c.bf16 %v236, %v233
    %v241 = vunpack.c.l.b16 %v239
    %v242 = vunpack.c.h.b16 %v239
    %v243 = vpack.c.b16 %v241, %v241
    %v244 = vpack.c.b16 %v242, %v242
    %vm247 = vcmask 257024
    %248 = vst.msk [vmem:[#allocation11] sm:$0xf] %vm247, %v243
    %249 = vst.msk [vmem:[#allocation11 + $0x4] sm:$0xf] %vm247, %v244
    %v250 = vld [vmem:[#allocation8] sm:$0xf]
    %v251 = vld [vmem:[#allocation8 + $0x4] sm:$0xf]
    %v252 = vld [vmem:[#allocation8 + $0x8] sm:$0xf]
    %v253 = vld [vmem:[#allocation8 + $0xc] sm:$0xf]
    %v258 = vunpack.c.l.b16 %v250
    %v259 = vunpack.c.l.b16 %v251
    %v260 = vunpack.c.l.b16 %v252
    %v261 = vunpack.c.l.b16 %v253
    %v262 = vpack.c.b16 %v259, %v258
    %v263 = vpack.c.b16 %v261, %v260
    %266 = vmatprep.subr.bf16.mxu0 0
    %267 = vmatpush1.bf16.msra.mxu0 0
    %268 = vmatprep.subr.bf16.mxu0 0
    %269 = vmatpush1.bf16.msra.mxu0 0
    %270 = vmatprep.subr.bf16.mxu0 0
    %271 = vmatpush1.bf16.msra.mxu0 0
    %272 = vmatprep.subr.bf16.mxu0 0
    %273 = vmatpush1.bf16.msra.mxu0 0
    %274 = vmatprep.subr.bf16.mxu0 0
    %275 = vmatpush1.bf16.msra.mxu0 0
    %276 = vmatprep.subr.bf16.mxu0 0
    %277 = vmatpush1.bf16.msra.mxu0 0
    %278 = vmatprep.subr.bf16.mxu0 0
    %279 = vmatpush1.bf16.msra.mxu0 %v263
    %280 = vmatprep.subr.bf16.mxu0 0
    %281 = vmatpush1.bf16.msra.mxu0 %v262
    %282 = vmatprep.subr.bf16.mxu0 0
    %283 = vmatpush2.bf16.msra.mxu0 0
    %284 = vmatprep.subr.bf16.mxu0 0
    %285 = vmatpush2.bf16.msra.mxu0 0
    %286 = vmatprep.subr.bf16.mxu0 0
    %287 = vmatpush2.bf16.msra.mxu0 0
    %288 = vmatprep.subr.bf16.mxu0 0
    %289 = vmatpush2.bf16.msra.mxu0 0
    %290 = vmatprep.subr.bf16.mxu0 0
    %291 = vmatpush2.bf16.msra.mxu0 0
    %292 = vmatprep.subr.bf16.mxu0 0
    %293 = vmatpush2.bf16.msra.mxu0 0
    %294 = vmatprep.subr.bf16.mxu0 0
    %295 = vmatpush2.bf16.msra.mxu0 0
    %296 = vmatprep.subr.bf16.mxu0 0
    %297 = vmatpush2.bf16.msra.mxu0 0
    %298 = vmatprep.mubr.bf16.mxu0 0
    %299 = vmatmul.mubr.bf16.gmra.mxu0 %v128
    %v300 = vpop.f32.mrf.mxu0
    %v301 = vadd.f32 0.0, %v300
    %v302 = vpop.f32.mrf.mxu0
    %v303 = vpop.f32.mrf.mxu0
    %v304 = vadd.f32 0.0, %v303
    %v305 = vpop.f32.mrf.mxu0
    %306 = vdwg.mxu0
    %v307 = vpack.c.bf16 %v304, %v301
    %v309 = vunpack.c.l.b16 %v307
    %v310 = vunpack.c.h.b16 %v307
    %v311 = vpack.c.b16 %v309, %v309
    %v312 = vpack.c.b16 %v310, %v310
    %315 = vst.msk [vmem:[#allocation13] sm:$0xf] %vm247, %v311
    %316 = vst.msk [vmem:[#allocation13 + $0x4] sm:$0xf] %vm247, %v312
    // Predicated region
    $region38: #{tpu_custom_call.1} parent=1 // pred_check
      _
    $region39: #{tpu_custom_call.1} parent=1 // pred_check_branch
      %318 = sbr.rel (0) target = $region41
    $region40: #{tpu_custom_call.1} parent=1 // pred_region
      %s320 = ssub.s32 128, 128
      %321 = vsyncadd [#allocation4], %s320
      %s322 = sshll.u32 [#allocation10], 4
      %s323 = int_to_ptr.vmem [resolvable:$true] %s322
      %328 = dma.vmem_to_hbm [thread:$0]  %s323, 128, %s5, [#allocation4], 64, 64, 4
    $region41: #{tpu_custom_call.1} parent=1 // pred_fallthru
      _
    // Predicated region
    $region42: #{tpu_custom_call.1} parent=1 // pred_check
      _
    $region43: #{tpu_custom_call.1} parent=1 // pred_check_branch
      %330 = sbr.rel (0) target = $region45
    $region44: #{tpu_custom_call.1} parent=1 // pred_region
      %s332 = ssub.s32 128, 128
      %333 = vsyncadd [#allocation12], %s332
      %s334 = sshll.u32 [#allocation11], 4
      %s335 = int_to_ptr.vmem [resolvable:$true] %s334
      %340 = dma.vmem_to_hbm [thread:$0]  %s335, 128, %s6, [#allocation12], 64, 64, 4
    $region45: #{tpu_custom_call.1} parent=1 // pred_fallthru
      _
    // Predicated region
    $region46: #{tpu_custom_call.1} parent=1 // pred_check
      _
    $region47: #{tpu_custom_call.1} parent=1 // pred_check_branch
      %342 = sbr.rel (0) target = $region49
    $region48: #{tpu_custom_call.1} parent=1 // pred_region
      %s344 = ssub.s32 128, 128
      %345 = vsyncadd [#allocation12], %s344
      %s346 = sshll.u32 [#allocation13], 4
      %s347 = int_to_ptr.vmem [resolvable:$true] %s346
      %352 = dma.vmem_to_hbm [thread:$0]  %s347, 128, %s7, [#allocation12], 64, 64, 4
    $region49: #{tpu_custom_call.1} parent=1 // pred_fallthru
      _
    // Predicated region
    $region50: #{tpu_custom_call.1} parent=1 // pred_check
      _
    $region51: #{tpu_custom_call.1} parent=1 // pred_check_branch
      %354 = sbr.rel (0) target = $region53
    $region52: #{tpu_custom_call.1} parent=1 // pred_region
      %355 = dma.done [#allocation4], 128
    $region53: #{tpu_custom_call.1} parent=1 // pred_fallthru
      _
    // Predicated region
    $region54: #{tpu_custom_call.1} parent=1 // pred_check
      _
    $region55: #{tpu_custom_call.1} parent=1 // pred_check_branch
      %357 = sbr.rel (0) target = $region57
    $region56: #{tpu_custom_call.1} parent=1 // pred_region
      %358 = dma.done [#allocation12], 128
    $region57: #{tpu_custom_call.1} parent=1 // pred_fallthru
      _
    // Predicated region
    $region58: #{tpu_custom_call.1} parent=1 // pred_check
      _
    $region59: #{tpu_custom_call.1} parent=1 // pred_check_branch
      %360 = sbr.rel (0) target = $region61
    $region60: #{tpu_custom_call.1} parent=1 // pred_region
      %361 = dma.done [#allocation12], 128
    $region61: #{tpu_custom_call.1} parent=1 // pred_fallthru
      _
    %362 = vsyncpa [#allocation3], 1
    %363 = vsyncpa [#allocation6], 1
    %364 = vsyncpa [#allocation9], 1
    %365 = vsyncpa [#allocation4], 1
    %366 = vsyncpa [#allocation12], 1

</llo_original>
